<compile_context>
chip_gen: v6e
topology: v6e:2x2x1
jax: 0.10.0
libtpu: 0.0.40
codegen_flags: <defaults>
</compile_context>

<pallas_src>
import functools

import jax
import jax.numpy as jnp
from jax import lax
from jax.experimental import pallas as pl
from jax.experimental.pallas import tpu as pltpu

OUT_W = 128  # lane-dense output slab width


def rnn_seq_kernel(h0_ref, w_ref, b_ref, out_ref, *, H, O, T):
    """Runs all T recurrent steps inside one kernel invocation."""
    B = h0_ref.shape[0]

    # Resident weights: static, sublane(8)-aligned views into the weight slab.
    w_ih = w_ref[0 * H:1 * H, :]                    # (H, H)
    w_eff = w_ref[1 * H:2 * H, :]                   # (H, H), cols O:H are zero

    # Loop-invariant values, hoisted out of the time loop.
    b_ih = jnp.broadcast_to(b_ref[0:1, :], (B, H))  # i2h bias
    b_eff = jnp.broadcast_to(b_ref[1:2, :], (B, H))  # folded i2o/o2o bias
    col = lax.broadcasted_iota(jnp.int32, (B, H), 1)
    valid = col < O                                  # valid output columns
    neg_inf = jnp.full((B, H), -jnp.inf, jnp.float32)
    pad = jnp.zeros((B, OUT_W - 2 * H), jnp.float32)

    def step(t, h):
        # hidden = i2h(hidden)
        h_new = jnp.dot(h, w_ih, preferred_element_type=jnp.float32) + b_ih

        # output = o2o(cat([hidden, i2o(hidden)], 1))  -- folded into one dot.
        o2 = jnp.dot(h_new, w_eff, preferred_element_type=jnp.float32) + b_eff

        # dropout(p=0.1): identity in eval mode.
        # TODO(synk): training-mode dropout (pltpu.prng_random_bits mask) not emitted.

        # Numerically stable log_softmax over the valid O columns only.
        o2m = jnp.where(valid, o2, neg_inf)
        m = jnp.max(o2m, axis=1, keepdims=True)
        s = o2m - m
        lse = jnp.log(jnp.sum(jnp.exp(s), axis=1, keepdims=True))
        logp = jnp.where(valid, s - lse, 0.0)        # padded lanes -> 0.0 (finite)

        # One full-lane-width store per step into the resident output slab.
        out_ref[t] = jnp.concatenate([logp, h_new, pad], axis=1)
        return h_new

    lax.fori_loop(0, T, step, h0_ref[...], unroll=True)


def pack_params(params):
    """Fold i2o into o2o and pack everything into two contiguous slabs."""
    H = params["w_i2h"].shape[0]
    O = params["w_i2o"].shape[1]
    assert O <= H and H % 8 == 0 and 2 * H <= OUT_W

    w_ooh = params["w_o2o"][:H]                      # (H, O)
    w_ooo = params["w_o2o"][H:]                      # (O, O)
    w_eff = w_ooh + params["w_i2o"] @ w_ooo          # (H, O)
    b_eff = params["b_i2o"] @ w_ooo + params["b_o2o"]  # (O,)

    w_eff_p = jnp.zeros((H, H), jnp.float32).at[:, :O].set(w_eff)
    wslab = jnp.concatenate([params["w_i2h"], w_eff_p], axis=0)  # (2H, H)

    bslab = (jnp.zeros((8, H), jnp.float32)
             .at[0, :H].set(params["b_i2h"])
             .at[1, :O].set(b_eff))
    return wslab, bslab


@functools.partial(jax.jit, static_argnames=("num_steps",))
def rnn_hidden4_scan(hidden0, params, num_steps):
    """Run `num_steps` RNN steps inside ONE no-grid pallas_call."""
    B, H = hidden0.shape
    O = params["w_i2o"].shape[1]
    wslab, bslab = pack_params(params)

    kernel = functools.partial(rnn_seq_kernel, H=H, O=O, T=num_steps)
    slab = pl.pallas_call(
        kernel,
        in_specs=[
            pl.BlockSpec(memory_space=pltpu.MemorySpace.VMEM),  # h0
            pl.BlockSpec(memory_space=pltpu.MemorySpace.VMEM),  # weight slab
            pl.BlockSpec(memory_space=pltpu.MemorySpace.VMEM),  # bias slab
        ],
        out_specs=pl.BlockSpec(memory_space=pltpu.MemorySpace.VMEM),
        out_shape=jax.ShapeDtypeStruct((num_steps, B, OUT_W), jnp.float32),
    )(hidden0, wslab, bslab)

    logp_seq = slab[:, :, :O]           # (T, B, O)
    hidden_seq = slab[:, :, H:2 * H]    # (T, B, H)
    return logp_seq, hidden_seq


def rnn_hidden4_forward(category, inp, hidden, params):
    """Single forward step (matches the PyTorch module's forward)."""
    del category, inp                   # unused by the PyTorch forward
    logp_seq, hidden_seq = rnn_hidden4_scan(hidden, params, num_steps=1)
    return logp_seq[0], hidden_seq[0]


def init_params(key, hidden_size, output_size):
    """Deterministic PyTorch-Linear-style init (uniform +/- 1/sqrt(fan_in))."""
    ks = jax.random.split(key, 6)

    def unif(k, shape, fan_in):
        bound = 1.0 / jnp.sqrt(jnp.float32(fan_in))
        return jax.random.uniform(k, shape, jnp.float32, -bound, bound)

    H, O = hidden_size, output_size
    return {
        # stored as (in, out) so kernel does x @ W
        "w_i2h": unif(ks[0], (H, H), H),
        "b_i2h": unif(ks[1], (H,), H),
        "w_i2o": unif(ks[2], (H, O), H),
        "b_i2o": unif(ks[3], (O,), H),
        "w_o2o": unif(ks[4], (H + O, O), H + O),
        "b_o2o": unif(ks[5], (O,), H + O),
    }


def reference_forward(hidden, params):
    """Plain-JAX reference of one module forward (unfolded, as in PyTorch)."""
    h_new = hidden @ params["w_i2h"] + params["b_i2h"]
    o = h_new @ params["w_i2o"] + params["b_i2o"]
    comb = jnp.concatenate([h_new, o], axis=1)
    o2 = comb @ params["w_o2o"] + params["b_o2o"]
    return jax.nn.log_softmax(o2, axis=1), h_new


def reference_scan(hidden0, params, num_steps):
    def step(h, _):
        logp, h_new = reference_forward(h, params)
        return h_new, (logp, h_new)
    _, (logp_seq, h_seq) = lax.scan(step, hidden0, None, length=num_steps)
    return logp_seq, h_seq


if __name__ == "__main__":
    key = jax.random.PRNGKey(0)
    k_param, k_hid, k_cat, k_inp = jax.random.split(key, 4)

    batch = 8            # sublane-full batch
    hidden_size = 32
    output_size = 16
    n_categories = 4     # module's global list is empty -> small synthetic count
    input_size = 8
    num_steps = 8

    params = init_params(k_param, hidden_size, output_size)

    # initHidden-style hidden state: [category_onehot-ish, zeros]
    category = jax.random.uniform(k_cat, (batch, n_categories), jnp.float32)
    hidden0 = jnp.concatenate(
        [category, jnp.zeros((batch, hidden_size - n_categories), jnp.float32)], axis=1)
    inp = jax.random.uniform(k_inp, (batch, input_size), jnp.float32)  # unused by forward

    # --- single step: matches the PyTorch module forward exactly ---
    out_logp, new_hidden = rnn_hidden4_forward(category, inp, hidden0, params)
    out_logp, new_hidden = jax.block_until_ready((out_logp, new_hidden))
    ref_logp, ref_hidden = reference_forward(hidden0, params)
    assert out_logp.shape == (batch, output_size)
    assert new_hidden.shape == (batch, hidden_size)
    assert jnp.allclose(out_logp, ref_logp, atol=1e-4, rtol=1e-4)
    assert jnp.allclose(new_hidden, ref_hidden, atol=1e-4, rtol=1e-4)

    # --- multi-step: whole recurrence inside ONE pallas_call ---
    logp_seq, hidden_seq = rnn_hidden4_scan(hidden0, params, num_steps)
    logp_seq, hidden_seq = jax.block_until_ready((logp_seq, hidden_seq))
    ref_logp_seq, ref_hidden_seq = reference_scan(hidden0, params, num_steps)
    assert logp_seq.shape == (num_steps, batch, output_size)
    assert hidden_seq.shape == (num_steps, batch, hidden_size)
    assert jnp.allclose(logp_seq, ref_logp_seq, atol=1e-4, rtol=1e-4)
    assert jnp.allclose(hidden_seq, ref_hidden_seq, atol=1e-4, rtol=1e-4)

    print("KERNEL_OK")
</pallas_src>

<mosaic_0001>
module attributes {stable_mosaic.version = 11 : i64} {
  func.func @rnn_seq_kernel(%arg0: memref<8x32xf32, #tpu.memory_space<vmem>>, %arg1: memref<64x32xf32, #tpu.memory_space<vmem>>, %arg2: memref<8x32xf32, #tpu.memory_space<vmem>>, %arg3: memref<1x8x128xf32, #tpu.memory_space<vmem>>) attributes {dimension_semantics = [], scalar_prefetch = 0 : i64, scratch_operands = 0 : i64, tpu.core_type = #tpu.core_type<tc>} {
    %c0 = arith.constant 0 : index
    %c0_0 = arith.constant 0 : index
    %0 = vector.load %arg1[%c0, %c0_0] : memref<64x32xf32, #tpu.memory_space<vmem>>, vector<32x32xf32>
    %c32 = arith.constant 32 : index
    %c0_1 = arith.constant 0 : index
    %1 = vector.load %arg1[%c32, %c0_1] : memref<64x32xf32, #tpu.memory_space<vmem>>, vector<32x32xf32>
    %c0_2 = arith.constant 0 : index
    %c0_3 = arith.constant 0 : index
    %2 = vector.load %arg2[%c0_2, %c0_3] : memref<8x32xf32, #tpu.memory_space<vmem>>, vector<1x32xf32>
    %3 = vector.shape_cast %2 : vector<1x32xf32> to vector<1x32xf32>
    %4 = vector.broadcast %3 : vector<1x32xf32> to vector<8x32xf32>
    %c1 = arith.constant 1 : index
    %c0_4 = arith.constant 0 : index
    %5 = vector.load %arg2[%c1, %c0_4] : memref<8x32xf32, #tpu.memory_space<vmem>>, vector<1x32xf32>
    %6 = vector.shape_cast %5 : vector<1x32xf32> to vector<1x32xf32>
    %7 = vector.broadcast %6 : vector<1x32xf32> to vector<8x32xf32>
    %8 = tpu.iota {dimensions = array<i32: 1>} : vector<8x32xi32>
    %c16_i32 = arith.constant 16 : i32
    %9 = vector.broadcast %c16_i32 : i32 to vector<8x32xi32>
    %10 = arith.cmpi slt, %8, %9 : vector<8x32xi32>
    %cst = arith.constant 0xFF800000 : f32
    %11 = vector.broadcast %cst : f32 to vector<8x32xf32>
    %cst_5 = arith.constant 0.000000e+00 : f32
    %12 = vector.broadcast %cst_5 : f32 to vector<8x64xf32>
    %c0_6 = arith.constant 0 : index
    %c0_7 = arith.constant 0 : index
    %13 = vector.load %arg0[%c0_6, %c0_7] : memref<8x32xf32, #tpu.memory_space<vmem>>, vector<8x32xf32>
    %c0_i32 = arith.constant 0 : i32
    %cst_8 = arith.constant dense<0.000000e+00> : vector<8x32xf32>
    %14 = tpu.matmul %13, %0, %cst_8 {dimension_numbers = #tpu.dot_dimension_numbers<[1], [0], [0], [1], [0, 0, 1, 1], [], []>} : vector<8x32xf32>, vector<32x32xf32>, vector<8x32xf32> -> vector<8x32xf32>
    %15 = arith.addf %14, %4 : vector<8x32xf32>
    %cst_9 = arith.constant dense<0.000000e+00> : vector<8x32xf32>
    %16 = tpu.matmul %15, %1, %cst_9 {dimension_numbers = #tpu.dot_dimension_numbers<[1], [0], [0], [1], [0, 0, 1, 1], [], []>} : vector<8x32xf32>, vector<32x32xf32>, vector<8x32xf32> -> vector<8x32xf32>
    %17 = arith.addf %16, %7 : vector<8x32xf32>
    %18 = arith.select %10, %17, %11 : vector<8x32xi1>, vector<8x32xf32>
    %cst_10 = arith.constant dense<0xFF800000> : vector<8xf32>
    %19 = vector.multi_reduction <maximumf>, %18, %cst_10 [1] : vector<8x32xf32> to vector<8xf32>
    %20 = vector.shape_cast %19 : vector<8xf32> to vector<8x1xf32>
    %21 = vector.broadcast %20 : vector<8x1xf32> to vector<8x32xf32>
    %22 = arith.subf %18, %21 : vector<8x32xf32>
    %23 = math.exp %22 : vector<8x32xf32>
    %cst_11 = arith.constant dense<0.000000e+00> : vector<8xf32>
    %24 = vector.multi_reduction <add>, %23, %cst_11 [1] : vector<8x32xf32> to vector<8xf32>
    %25 = vector.shape_cast %24 : vector<8xf32> to vector<8x1xf32>
    %26 = math.log %25 : vector<8x1xf32>
    %27 = vector.broadcast %26 : vector<8x1xf32> to vector<8x32xf32>
    %28 = arith.subf %22, %27 : vector<8x32xf32>
    %cst_12 = arith.constant 0.000000e+00 : f32
    %29 = vector.broadcast %cst_12 : f32 to vector<8x32xf32>
    %30 = arith.select %10, %28, %29 : vector<8x32xi1>, vector<8x32xf32>
    %31 = tpu.concatenate %30, %15, %12 in 1 : vector<8x32xf32>, vector<8x32xf32>, vector<8x64xf32> -> vector<8x128xf32>
    %32 = arith.index_cast %c0_i32 : i32 to index
    %c0_13 = arith.constant 0 : index
    %c0_14 = arith.constant 0 : index
    %33 = vector.load %arg3[%32, %c0_13, %c0_14] : memref<1x8x128xf32, #tpu.memory_space<vmem>>, vector<1x8x128xf32>
    %34 = vector.shape_cast %33 : vector<1x8x128xf32> to vector<8x128xf32>
    %35 = vector.shape_cast %31 : vector<8x128xf32> to vector<1x8x128xf32>
    tpu.vector_store %arg3[%32, %c0_13, %c0_14], %35 {strides = array<i32>} : memref<1x8x128xf32, #tpu.memory_space<vmem>>, vector<1x8x128xf32>,
    %c1_i32 = arith.constant 1 : i32
    return
  }
}

</mosaic_0001>

<llo_original>
// kernel: rnn_hidden4_scan.1
$region0: #{rnn_hidden4_scan.1}
  #allocation0 [shape = 'u32[]', space=smem, size = 0x4, offset = 0x4, fixed_abs, tag = 'smem constant byte address 0x4 - core index']
  #allocation1 [shape = 'u32[144,128]{1,0:T(1,128)}', space=vmem, size = 0x12000, scoped, tag = 'internal scratch']
  %s0 = inlined_call_operand.vmem [shape: f32[8,32], index: 0, kind: input, shape index: {}]
  %s1 = inlined_call_operand.vmem [shape: f32[64,32], index: 1, kind: input, shape index: {}]
  %s2 = inlined_call_operand.vmem [shape: f32[8,32], index: 2, kind: input, shape index: {}]
  %s3 = inlined_call_operand.vmem [shape: f32[1,8,128], index: 3, kind: output, shape index: {}]
  %s4 = sld [smem:[#allocation0]]
  $region22: #{rnn_hidden4_scan.1} parent=0
    _
  %s6 = ssub.s32 1, %s4
  %s7 = scalar_select 0, %s6, %s4
  // Predicated region
  $region2: #{rnn_hidden4_scan.1} parent=0 // pred_check
    _
  $region3: #{rnn_hidden4_scan.1} parent=0 // pred_check_branch
    %9 = sbr.rel (0) target = $region5
  $region4: #{rnn_hidden4_scan.1} parent=0 // pred_region
    _
  $region5: #{rnn_hidden4_scan.1} parent=0 // pred_fallthru
    _
  // Predicated region
  $region6: #{rnn_hidden4_scan.1} parent=0 // pred_check
    _
  $region7: #{rnn_hidden4_scan.1} parent=0 // pred_check_branch
    %11 = sbr.rel (0) target = $region9
  $region8: #{rnn_hidden4_scan.1} parent=0 // pred_region
    _
  $region9: #{rnn_hidden4_scan.1} parent=0 // pred_fallthru
    _
  // Predicated region
  $region10: #{rnn_hidden4_scan.1} parent=0 // pred_check
    _
  $region11: #{rnn_hidden4_scan.1} parent=0 // pred_check_branch
    %13 = sbr.rel (0) target = $region13
  $region12: #{rnn_hidden4_scan.1} parent=0 // pred_region
    _
  $region13: #{rnn_hidden4_scan.1} parent=0 // pred_fallthru
    _
  %v14 = vld [vmem:[%s1] sm:$0xff]
  %v15 = vld [vmem:[%s1 + $0x8] sm:$0xff]
  %v16 = vld [vmem:[%s1 + $0x10] sm:$0xff]
  %v17 = vld [vmem:[%s1 + $0x18] sm:$0xff]
  %v18 = vld [vmem:[%s1 + $0x20] sm:$0xff]
  %v19 = vld [vmem:[%s1 + $0x28] sm:$0xff]
  %v20 = vld [vmem:[%s1 + $0x30] sm:$0xff]
  %v21 = vld [vmem:[%s1 + $0x38] sm:$0xff]
  %v22 = vld [vmem:[%s2] sm:$0x1]
  %v23 = vlaneseq
  %v24 = vshrl.u32 %v23, 7
  %v25 = vsub.s32 0, %v24
  %v26 = vrot.slane %v22, %v25
  %v27 = vld [vmem:[%s2 + $0x1] sm:$0x1]
  %v28 = vlaneseq
  %v29 = vshrl.u32 %v28, 7
  %v30 = vsub.s32 0, %v29
  %v31 = vrot.slane %v27, %v30
  %v32 = vlaneseq
  %v33 = vand.u32 %v32, 127
  %vm34 = vcmp.lt.s32.totalorder %v33, 16
  %v35 = vld [vmem:[%s0] sm:$0xff]
  %vm36 = vcmask 261120
  %v38 = vsel %vm36, %v35, 0
  %40 = vmatprep.subr.mxu0 0.0
  %41 = vmatpush1.msra.mxu0 0.0
  %42 = vmatprep.subr.mxu0 0.0
  %43 = vmatpush1.msra.mxu0 0.0
  %44 = vmatprep.subr.mxu0 0.0
  %45 = vmatpush1.msra.mxu0 0.0
  %46 = vmatprep.subr.mxu0 0.0
  %47 = vmatpush1.msra.mxu0 0.0
  %48 = vmatprep.subr.mxu0 0.0
  %49 = vmatpush1.msra.mxu0 0.0
  %50 = vmatprep.subr.mxu0 0.0
  %51 = vmatpush1.msra.mxu0 0.0
  %52 = vmatprep.subr.mxu0 0.0
  %53 = vmatpush1.msra.mxu0 0.0
  %54 = vmatprep.subr.mxu0 0.0
  %55 = vmatpush1.msra.mxu0 0.0
  %56 = vmatprep.subr.mxu0 0.0
  %57 = vmatpush1.msra.mxu0 0.0
  %58 = vmatprep.subr.mxu0 0.0
  %59 = vmatpush1.msra.mxu0 0.0
  %60 = vmatprep.subr.mxu0 0.0
  %61 = vmatpush1.msra.mxu0 0.0
  %62 = vmatprep.subr.mxu0 0.0
  %63 = vmatpush1.msra.mxu0 0.0
  %64 = vmatprep.subr.mxu0 0.0
  %65 = vmatpush1.msra.mxu0 %v17
  %66 = vmatprep.subr.mxu0 0.0
  %67 = vmatpush1.msra.mxu0 %v16
  %68 = vmatprep.subr.mxu0 0.0
  %69 = vmatpush1.msra.mxu0 %v15
  %70 = vmatprep.subr.mxu0 0.0
  %71 = vmatpush1.msra.mxu0 %v14
  %72 = vmatprep.subr.mxu0 0.0
  %73 = vmatpush2.msra.mxu0 0.0
  %74 = vmatprep.subr.mxu0 0.0
  %75 = vmatpush2.msra.mxu0 0.0
  %76 = vmatprep.subr.mxu0 0.0
  %77 = vmatpush2.msra.mxu0 0.0
  %78 = vmatprep.subr.mxu0 0.0
  %79 = vmatpush2.msra.mxu0 0.0
  %80 = vmatprep.subr.mxu0 0.0
  %81 = vmatpush2.msra.mxu0 0.0
  %82 = vmatprep.subr.mxu0 0.0
  %83 = vmatpush2.msra.mxu0 0.0
  %84 = vmatprep.subr.mxu0 0.0
  %85 = vmatpush2.msra.mxu0 0.0
  %86 = vmatprep.subr.mxu0 0.0
  %87 = vmatpush2.msra.mxu0 0.0
  %88 = vmatprep.subr.mxu0 0.0
  %89 = vmatpush2.msra.mxu0 0.0
  %90 = vmatprep.subr.mxu0 0.0
  %91 = vmatpush2.msra.mxu0 0.0
  %92 = vmatprep.subr.mxu0 0.0
  %93 = vmatpush2.msra.mxu0 0.0
  %94 = vmatprep.subr.mxu0 0.0
  %95 = vmatpush2.msra.mxu0 0.0
  %96 = vmatprep.subr.mxu0 0.0
  %97 = vmatpush2.msra.mxu0 0.0
  %98 = vmatprep.subr.mxu0 0.0
  %99 = vmatpush2.msra.mxu0 0.0
  %100 = vmatprep.subr.mxu0 0.0
  %101 = vmatpush2.msra.mxu0 0.0
  %102 = vmatprep.subr.mxu0 0.0
  %103 = vmatpush2.msra.mxu0 0.0
  %104 = vmatprep.mubr.f32.mxu0 0.0
  %105 = vmatmul.mubr.f32.gmra.mxu0 %v38
  %v106 = vpop.f32.mrf.mxu0
  %v107 = vadd.f32 %v26, %v106
  %v108 = vpop.f32.mrf.mxu0
  %109 = vdwg.mxu0
  %v111 = vsel %vm36, %v107, 0
  %113 = vmatprep.subr.mxu0 0.0
  %114 = vmatpush1.msra.mxu0 0.0
  %115 = vmatprep.subr.mxu0 0.0
  %116 = vmatpush1.msra.mxu0 0.0
  %117 = vmatprep.subr.mxu0 0.0
  %118 = vmatpush1.msra.mxu0 0.0
  %119 = vmatprep.subr.mxu0 0.0
  %120 = vmatpush1.msra.mxu0 0.0
  %121 = vmatprep.subr.mxu0 0.0
  %122 = vmatpush1.msra.mxu0 0.0
  %123 = vmatprep.subr.mxu0 0.0
  %124 = vmatpush1.msra.mxu0 0.0
  %125 = vmatprep.subr.mxu0 0.0
  %126 = vmatpush1.msra.mxu0 0.0
  %127 = vmatprep.subr.mxu0 0.0
  %128 = vmatpush1.msra.mxu0 0.0
  %129 = vmatprep.subr.mxu0 0.0
  %130 = vmatpush1.msra.mxu0 0.0
  %131 = vmatprep.subr.mxu0 0.0
  %132 = vmatpush1.msra.mxu0 0.0
  %133 = vmatprep.subr.mxu0 0.0
  %134 = vmatpush1.msra.mxu0 0.0
  %135 = vmatprep.subr.mxu0 0.0
  %136 = vmatpush1.msra.mxu0 0.0
  %137 = vmatprep.subr.mxu0 0.0
  %138 = vmatpush1.msra.mxu0 %v21
  %139 = vmatprep.subr.mxu0 0.0
  %140 = vmatpush1.msra.mxu0 %v20
  %141 = vmatprep.subr.mxu0 0.0
  %142 = vmatpush1.msra.mxu0 %v19
  %143 = vmatprep.subr.mxu0 0.0
  %144 = vmatpush1.msra.mxu0 %v18
  %145 = vmatprep.subr.mxu0 0.0
  %146 = vmatpush2.msra.mxu0 0.0
  %147 = vmatprep.subr.mxu0 0.0
  %148 = vmatpush2.msra.mxu0 0.0
  %149 = vmatprep.subr.mxu0 0.0
  %150 = vmatpush2.msra.mxu0 0.0
  %151 = vmatprep.subr.mxu0 0.0
  %152 = vmatpush2.msra.mxu0 0.0
  %153 = vmatprep.subr.mxu0 0.0
  %154 = vmatpush2.msra.mxu0 0.0
  %155 = vmatprep.subr.mxu0 0.0
  %156 = vmatpush2.msra.mxu0 0.0
  %157 = vmatprep.subr.mxu0 0.0
  %158 = vmatpush2.msra.mxu0 0.0
  %159 = vmatprep.subr.mxu0 0.0
  %160 = vmatpush2.msra.mxu0 0.0
  %161 = vmatprep.subr.mxu0 0.0
  %162 = vmatpush2.msra.mxu0 0.0
  %163 = vmatprep.subr.mxu0 0.0
  %164 = vmatpush2.msra.mxu0 0.0
  %165 = vmatprep.subr.mxu0 0.0
  %166 = vmatpush2.msra.mxu0 0.0
  %167 = vmatprep.subr.mxu0 0.0
  %168 = vmatpush2.msra.mxu0 0.0
  %169 = vmatprep.subr.mxu0 0.0
  %170 = vmatpush2.msra.mxu0 0.0
  %171 = vmatprep.subr.mxu0 0.0
  %172 = vmatpush2.msra.mxu0 0.0
  %173 = vmatprep.subr.mxu0 0.0
  %174 = vmatpush2.msra.mxu0 0.0
  %175 = vmatprep.subr.mxu0 0.0
  %176 = vmatpush2.msra.mxu0 0.0
  %177 = vmatprep.mubr.f32.mxu0 0.0
  %178 = vmatmul.mubr.f32.gmra.mxu0 %v111
  %v179 = vpop.f32.mrf.mxu0
  %v180 = vadd.f32 %v31, %v179
  %v181 = vpop.f32.mrf.mxu0
  %182 = vdwg.mxu0
  %v183 = vsel %vm34, %v180, -inf
  %v184 = vsel %vm36, %v183, -inf
  %185 = vmax.xlane.f32.xlu0 %v184
  %v186 = vpop.xlane.xlu0 %185
  %v187 = vsub.f32 %v183, %v186
  %v188 = vmul.f32 %v187, 1.442695
  %v189 = vpow.pop %v188
  %v190 = vsel %vm36, %v189, 0.0
  %191 = vadd.xlane.f32.xlu0 %v190
  %v192 = vpop.xlane.xlu0 %191
  %v193 = vlog2.pop %v192
  %v194 = vmul.f32 %v193, 0.6931472
  %v195 = vsub.f32 %v187, %v194
  %v196 = vsel %vm34, %v195, 0.0
  %197 = vrot.lane.b32.xlu0 %v107, 32
  %v198 = vpop.permute.xlu0 %197
  %v200 = vsel %vm36, %v196, %v198
  %vm201 = vcmask 523264
  %v202 = vsel %vm201, %v200, 0.0
  %203 = vst [vmem:[%s3] sm:$0xff] %v202
  // Predicated region
  $region14: #{rnn_hidden4_scan.1} parent=0 // pred_check
    _
  $region15: #{rnn_hidden4_scan.1} parent=0 // pred_check_branch
    %205 = sbr.rel (0) target = $region17
  $region16: #{rnn_hidden4_scan.1} parent=0 // pred_region
    _
  $region17: #{rnn_hidden4_scan.1} parent=0 // pred_fallthru
    _
  // Predicated region
  $region18: #{rnn_hidden4_scan.1} parent=0 // pred_check
    _
  $region19: #{rnn_hidden4_scan.1} parent=0 // pred_check_branch
    %207 = sbr.rel (0) target = $region21
  $region20: #{rnn_hidden4_scan.1} parent=0 // pred_region
    _
  $region21: #{rnn_hidden4_scan.1} parent=0 // pred_fallthru
    _

</llo_original>
